<compile_context>
chip_gen: v6e
topology: v6e:2x2x1
jax: 0.10.0
libtpu: 0.0.40
codegen_flags: <defaults>
</compile_context>

<pallas_src>
import functools
import math

import jax
import jax.numpy as jnp
from jax.experimental import pallas as pl
from jax.experimental.pallas import tpu as pltpu


# ---------------------------------------------------------------------------
# Fused OverlapPatchEmbed kernel: conv-as-matmul + bias + channels_first LN
# ---------------------------------------------------------------------------
def _patch_embed_kernel(x_ref, w_ref, b_ref, g_ref, bt_ref, o_ref, *, eps):
    # x_ref : (K, tn)   im2col patches, channels-first (K = C*kh*kw)
    # w_ref : (E, K)    conv weight (PyTorch layout, flattened; no transpose)
    # b_ref : (E, 1)    conv bias
    # g_ref : (E, 1)    LayerNorm gamma
    # bt_ref: (E, 1)    LayerNorm beta
    # o_ref : (E, tn)   channels-first output tile (lane dim = spatial)
    y = jnp.dot(w_ref[...], x_ref[...], preferred_element_type=jnp.float32)
    y = y + b_ref[...]
    # channels_first LayerNorm: normalize over the channel (sublane) axis.
    mu = jnp.mean(y, axis=0, keepdims=True)
    var = jnp.mean((y - mu) * (y - mu), axis=0, keepdims=True)
    y = (y - mu) * jax.lax.rsqrt(var + eps)
    o_ref[...] = (g_ref[...] * y + bt_ref[...]).astype(o_ref.dtype)


def _pick_spatial_tile(n, k, e, bytes_per_elem=4, vmem_budget=24 * 1024 * 1024):
    """Largest spatial tile that fits double-buffered VMEM (+ resident weight)."""
    denom = 2 * (k + e) * bytes_per_elem
    cap = max(128, (vmem_budget - k * e * bytes_per_elem) // denom)
    if n <= cap:
        return n                       # single tile == full dim (always legal)
    t = (cap // 128) * 128             # otherwise: a multiple of 128 dividing n
    while t >= 128:
        if n % t == 0:
            return t
        t -= 128
    return n                           # fallback: one full-extent tile


def overlap_patch_embed(x, conv_w, conv_b, ln_g, ln_b, *, stride, padding, eps=1e-6):
    """Fused OverlapPatchEmbed forward (channels-first in, channels-first out).

    x      : (B, C, H, W)
    conv_w : (E, C, kh, kw)  PyTorch Conv2d weight
    conv_b : (E,)            Conv2d bias
    ln_g   : (E,)            channels_first LayerNorm weight
    ln_b   : (E,)            channels_first LayerNorm bias
    Returns (y, H_out, W_out) with y: (B, E, H_out, W_out).
    """
    B, C, H, W = x.shape
    E, _, kh, kw = conv_w.shape

    # im2col glue (overlapping windows cannot be expressed as a rectangular
    # BlockSpec).  Feature order is channel-major -> matches conv_w.reshape.
    # TODO(synk): move patch extraction in-kernel via strided DMA to save a pass.
    patches = jax.lax.conv_general_dilated_patches(
        x,
        filter_shape=(kh, kw),
        window_strides=(stride, stride),
        padding=((padding, padding), (padding, padding)),
        dimension_numbers=("NCHW", "OIHW", "NCHW"),
    )                                           # (B, C*kh*kw, Ho, Wo)
    _, K, Ho, Wo = patches.shape
    N = Ho * Wo
    patches = patches.reshape(B, K, N)

    w2d = conv_w.reshape(E, K)                  # view; no transpose materialized
    b2d = conv_b.reshape(E, 1)
    g2d = ln_g.reshape(E, 1)
    bt2d = ln_b.reshape(E, 1)

    tn = _pick_spatial_tile(N, K, E)
    grid = (B, N // tn)                         # (batch, spatial tiles)

    kernel = functools.partial(_patch_embed_kernel, eps=eps)
    y = pl.pallas_call(
        kernel,
        out_shape=jax.ShapeDtypeStruct((B, E, N), x.dtype),
        grid_spec=pltpu.PrefetchScalarGridSpec(
            num_scalar_prefetch=0,
            grid=grid,
            in_specs=[
                pl.BlockSpec((None, K, tn), lambda b, j: (b, 0, j)),  # patches
                pl.BlockSpec((E, K), lambda b, j: (0, 0)),            # weight
                pl.BlockSpec((E, 1), lambda b, j: (0, 0)),            # conv bias
                pl.BlockSpec((E, 1), lambda b, j: (0, 0)),            # LN gamma
                pl.BlockSpec((E, 1), lambda b, j: (0, 0)),            # LN beta
            ],
            out_specs=pl.BlockSpec((None, E, tn), lambda b, j: (b, 0, j)),
        ),
        compiler_params=pltpu.CompilerParams(
            dimension_semantics=("parallel", "parallel"),
            vmem_limit_bytes=32 * 1024 * 1024,
        ),
    )(patches, w2d, b2d, g2d, bt2d)

    return y.reshape(B, E, Ho, Wo), Ho, Wo


# ---------------------------------------------------------------------------
# Plain-JAX reference for one OverlapPatchEmbed stage (conv + channels_first LN)
# ---------------------------------------------------------------------------
def _ref_patch_embed(x, conv_w, conv_b, ln_g, ln_b, *, stride, padding, eps=1e-6):
    y = jax.lax.conv_general_dilated(
        x, conv_w, (stride, stride),
        ((padding, padding), (padding, padding)),
        dimension_numbers=("NCHW", "OIHW", "NCHW"))
    y = y + conv_b[None, :, None, None]
    mu = y.mean(axis=1, keepdims=True)
    var = ((y - mu) ** 2).mean(axis=1, keepdims=True)
    y = (y - mu) / jnp.sqrt(var + eps)
    return ln_g[None, :, None, None] * y + ln_b[None, :, None, None]


if __name__ == "__main__":
    # Small config consistent with EncoderTransformer:
    #   in_chans=3, embed_dims=[32, 64, 128, 256], stage1 patch 7/stride 4,
    #   stages 2-4 patch 3/stride 2.  Small image: 64x64, batch 2.
    B, C_in, img = 2, 3, 64
    embed_dims = [32, 64, 128, 256]
    stage_cfg = [(7, 4), (3, 2), (3, 2), (3, 2)]      # (patch_size, stride)

    key = jax.random.PRNGKey(0)
    x = jax.random.normal(jax.random.fold_in(key, 0), (B, C_in, img, img),
                          dtype=jnp.float32)

    feats = x
    in_ch = C_in
    outs = []
    for s, ((ksize, stride), E) in enumerate(zip(stage_cfg, embed_dims)):
        kp = jax.random.fold_in(key, 100 + s)
        kw_, kb_, kg_, kbeta_ = jax.random.split(kp, 4)
        fan_out = ksize * ksize * E
        conv_w = jax.random.normal(kw_, (E, in_ch, ksize, ksize),
                                   dtype=jnp.float32) * math.sqrt(2.0 / fan_out)
        conv_b = 0.02 * jax.random.normal(kb_, (E,), dtype=jnp.float32)
        ln_g = 1.0 + 0.02 * jax.random.normal(kg_, (E,), dtype=jnp.float32)
        ln_b = 0.02 * jax.random.normal(kbeta_, (E,), dtype=jnp.float32)

        pad = ksize // 2
        y, Ho, Wo = overlap_patch_embed(feats, conv_w, conv_b, ln_g, ln_b,
                                        stride=stride, padding=pad)
        y = jax.block_until_ready(y)

        y_ref = _ref_patch_embed(feats, conv_w, conv_b, ln_g, ln_b,
                                 stride=stride, padding=pad)
        assert y.shape == (B, E, Ho, Wo), (y.shape, (B, E, Ho, Wo))
        # Tolerance covers TPU f32 matmul/conv default-precision differences.
        assert jnp.allclose(y, y_ref, atol=2e-2, rtol=2e-2), (
            f"stage {s + 1} max abs err "
            f"{float(jnp.max(jnp.abs(y - y_ref))):.3e}")

        # TODO(synk): EncoderBlock (dim_head attention/FFN) and the per-stage
        # norm_layer are not defined in the provided spec; stage blocks skipped.
        outs.append(y)
        feats = y
        in_ch = E

    print("KERNEL_OK")
</pallas_src>

<mosaic_0001>
module attributes {stable_mosaic.version = 11 : i64} {
  func.func @_patch_embed_kernel(%arg0: i32, %arg1: i32, %arg2: memref<1x147x256xf32, #tpu.memory_space<vmem>>, %arg3: memref<32x147xf32, #tpu.memory_space<vmem>>, %arg4: memref<32x1xf32, #tpu.memory_space<vmem>>, %arg5: memref<32x1xf32, #tpu.memory_space<vmem>>, %arg6: memref<32x1xf32, #tpu.memory_space<vmem>>, %arg7: memref<1x32x256xf32, #tpu.memory_space<vmem>>) attributes {dimension_semantics = [#tpu.dimension_semantics<parallel>, #tpu.dimension_semantics<parallel>], iteration_bounds = array<i64: 2, 1>, scalar_prefetch = 0 : i64, scratch_operands = 0 : i64, tpu.core_type = #tpu.core_type<tc>, window_params = [{transform_indices = @transform_0, window_bounds = array<i64: 1, 147, 256>}, {pipeline_mode = #tpu.pipeline_mode<synchronous>, transform_indices = @transform_1, window_bounds = array<i64: 32, 147>}, {pipeline_mode = #tpu.pipeline_mode<synchronous>, transform_indices = @transform_2, window_bounds = array<i64: 32, 1>}, {pipeline_mode = #tpu.pipeline_mode<synchronous>, transform_indices = @transform_3, window_bounds = array<i64: 32, 1>}, {pipeline_mode = #tpu.pipeline_mode<synchronous>, transform_indices = @transform_4, window_bounds = array<i64: 32, 1>}, {transform_indices = @transform_5, window_bounds = array<i64: 1, 32, 256>}]} {
    %c0 = arith.constant 0 : index
    %c0_0 = arith.constant 0 : index
    %0 = vector.load %arg3[%c0, %c0_0] : memref<32x147xf32, #tpu.memory_space<vmem>>, vector<32x147xf32>
    %c0_1 = arith.constant 0 : index
    %c0_2 = arith.constant 0 : index
    %c0_3 = arith.constant 0 : index
    %1 = vector.load %arg2[%c0_1, %c0_2, %c0_3] : memref<1x147x256xf32, #tpu.memory_space<vmem>>, vector<1x147x256xf32>
    %2 = vector.shape_cast %1 : vector<1x147x256xf32> to vector<147x256xf32>
    %cst = arith.constant dense<0.000000e+00> : vector<32x256xf32>
    %3 = tpu.matmul %0, %2, %cst {dimension_numbers = #tpu.dot_dimension_numbers<[1], [0], [0], [1], [0, 0, 1, 1], [], []>} : vector<32x147xf32>, vector<147x256xf32>, vector<32x256xf32> -> vector<32x256xf32>
    %c0_4 = arith.constant 0 : index
    %c0_5 = arith.constant 0 : index
    %4 = vector.load %arg4[%c0_4, %c0_5] : memref<32x1xf32, #tpu.memory_space<vmem>>, vector<32x1xf32>
    %5 = vector.broadcast %4 : vector<32x1xf32> to vector<32x256xf32>
    %6 = arith.addf %3, %5 : vector<32x256xf32>
    %cst_6 = arith.constant dense<0.000000e+00> : vector<256xf32>
    %7 = vector.multi_reduction <add>, %6, %cst_6 [0] : vector<32x256xf32> to vector<256xf32>
    %8 = vector.shape_cast %7 : vector<256xf32> to vector<1x256xf32>
    %cst_7 = arith.constant 3.200000e+01 : f32
    %9 = vector.broadcast %cst_7 : f32 to vector<1x256xf32>
    %10 = arith.divf %8, %9 : vector<1x256xf32>
    %11 = vector.broadcast %10 : vector<1x256xf32> to vector<32x256xf32>
    %12 = arith.subf %6, %11 : vector<32x256xf32>
    %13 = vector.broadcast %10 : vector<1x256xf32> to vector<32x256xf32>
    %14 = arith.subf %6, %13 : vector<32x256xf32>
    %15 = arith.mulf %12, %14 : vector<32x256xf32>
    %cst_8 = arith.constant dense<0.000000e+00> : vector<256xf32>
    %16 = vector.multi_reduction <add>, %15, %cst_8 [0] : vector<32x256xf32> to vector<256xf32>
    %17 = vector.shape_cast %16 : vector<256xf32> to vector<1x256xf32>
    %cst_9 = arith.constant 3.200000e+01 : f32
    %18 = vector.broadcast %cst_9 : f32 to vector<1x256xf32>
    %19 = arith.divf %17, %18 : vector<1x256xf32>
    %20 = vector.broadcast %10 : vector<1x256xf32> to vector<32x256xf32>
    %21 = arith.subf %6, %20 : vector<32x256xf32>
    %cst_10 = arith.constant 9.99999997E-7 : f32
    %22 = vector.broadcast %cst_10 : f32 to vector<1x256xf32>
    %23 = arith.addf %19, %22 : vector<1x256xf32>
    %24 = math.rsqrt %23 : vector<1x256xf32>
    %25 = vector.broadcast %24 : vector<1x256xf32> to vector<32x256xf32>
    %26 = arith.mulf %21, %25 : vector<32x256xf32>
    %c0_11 = arith.constant 0 : index
    %c0_12 = arith.constant 0 : index
    %27 = vector.load %arg5[%c0_11, %c0_12] : memref<32x1xf32, #tpu.memory_space<vmem>>, vector<32x1xf32>
    %28 = vector.broadcast %27 : vector<32x1xf32> to vector<32x256xf32>
    %29 = arith.mulf %28, %26 : vector<32x256xf32>
    %c0_13 = arith.constant 0 : index
    %c0_14 = arith.constant 0 : index
    %30 = vector.load %arg6[%c0_13, %c0_14] : memref<32x1xf32, #tpu.memory_space<vmem>>, vector<32x1xf32>
    %31 = vector.broadcast %30 : vector<32x1xf32> to vector<32x256xf32>
    %32 = arith.addf %29, %31 : vector<32x256xf32>
    %c0_15 = arith.constant 0 : index
    %c0_16 = arith.constant 0 : index
    %c0_17 = arith.constant 0 : index
    %33 = vector.load %arg7[%c0_15, %c0_16, %c0_17] : memref<1x32x256xf32, #tpu.memory_space<vmem>>, vector<1x32x256xf32>
    %34 = vector.shape_cast %33 : vector<1x32x256xf32> to vector<32x256xf32>
    %35 = vector.shape_cast %32 : vector<32x256xf32> to vector<1x32x256xf32>
    tpu.vector_store %arg7[%c0_15, %c0_16, %c0_17], %35 {strides = array<i32>} : memref<1x32x256xf32, #tpu.memory_space<vmem>>, vector<1x32x256xf32>,
    return
  }
  func.func @transform_0(%arg0: i32, %arg1: i32) -> (i32, i32, i32) {
    %c0_i32 = arith.constant 0 : i32
    %c0_i32_0 = arith.constant 0 : i32
    return %arg0, %c0_i32, %arg1 : i32, i32, i32
  }
  func.func @transform_1(%arg0: i32, %arg1: i32) -> (i32, i32) {
    %c0_i32 = arith.constant 0 : i32
    %c0_i32_0 = arith.constant 0 : i32
    %c0_i32_1 = arith.constant 0 : i32
    return %c0_i32, %c0_i32_0 : i32, i32
  }
  func.func @transform_2(%arg0: i32, %arg1: i32) -> (i32, i32) {
    %c0_i32 = arith.constant 0 : i32
    %c0_i32_0 = arith.constant 0 : i32
    %c0_i32_1 = arith.constant 0 : i32
    return %c0_i32, %c0_i32_0 : i32, i32
  }
  func.func @transform_3(%arg0: i32, %arg1: i32) -> (i32, i32) {
    %c0_i32 = arith.constant 0 : i32
    %c0_i32_0 = arith.constant 0 : i32
    %c0_i32_1 = arith.constant 0 : i32
    return %c0_i32, %c0_i32_0 : i32, i32
  }
  func.func @transform_4(%arg0: i32, %arg1: i32) -> (i32, i32) {
    %c0_i32 = arith.constant 0 : i32
    %c0_i32_0 = arith.constant 0 : i32
    %c0_i32_1 = arith.constant 0 : i32
    return %c0_i32, %c0_i32_0 : i32, i32
  }
  func.func @transform_5(%arg0: i32, %arg1: i32) -> (i32, i32, i32) {
    %c0_i32 = arith.constant 0 : i32
    %c0_i32_0 = arith.constant 0 : i32
    return %arg0, %c0_i32, %arg1 : i32, i32, i32
  }
}

</mosaic_0001>

<llo_original>
// kernel: tpu_custom_call.1
$region0: #{tpu_custom_call.1}
  #allocation0 [shape = 'u32[]', space=smem, size = 0x4, offset = 0x4, fixed_abs, tag = 'smem constant byte address 0x4 - core index']
  #allocation1 [shape = 'u32[144,128]{1,0:T(1,128)}', space=vmem, size = 0x12000, scoped, tag = 'internal scratch']
  %s0 = inlined_call_operand.vmem [shape: f32[2,147,256], index: 0, kind: input, shape index: {}]
  %s1 = inlined_call_operand.vmem [shape: f32[32,147], index: 1, kind: input, shape index: {}]
  %s2 = inlined_call_operand.vmem [shape: f32[32,1], index: 2, kind: input, shape index: {}]
  %s3 = inlined_call_operand.vmem [shape: f32[32,1], index: 3, kind: input, shape index: {}]
  %s4 = inlined_call_operand.vmem [shape: f32[32,1], index: 4, kind: input, shape index: {}]
  %s5 = inlined_call_operand.hbm [shape: f32[2,32,256], index: 5, kind: output, shape index: {}]
  %s6 = sld [smem:[#allocation0]]
  $region53: #{tpu_custom_call.1} parent=0
    _
  %s8 = ssub.s32 1, %s6
  %s9 = scalar_select 0, %s8, %s6
  $region1: #{tpu_custom_call.1} parent=0
    #allocation2 [shape = 'u8[65536]{0}', space=vmem, size = 0x10000, scoped, tag = 'output window, operand 0']
    #allocation3 [shape = 's32[2]{0}', space=sflag, size = 0x8, scoped, tag = 'scoped memory for tpu_custom_call.1']
    %10 = vsyncpa [#allocation3], 0
    %s11 = scalar_lea.sflag [#allocation3], 1
    %12 = vsyncpa %s11, 0
    loop: start=0, step=1, limit=4
    $region2: #{tpu_custom_call.1} parent=1 // loop_pre_header
      _
    $region3: #{tpu_custom_call.1} parent=1 // loop_header
      %s14 = sphi 0, %s18
      %p15 = scmp.ge.s32.totalorder %s14, 4
      %s21 = sphi 0, %s33
      %s22 = sphi 0, %s29
      %s23 = sphi 0, %s21
      %s24 = sphi 0, %s22
      %s25 = sphi 0, %s23
      %s26 = sphi 0, %s24
      %s38 = sphi 0, %s40
      %s41 = sphi 0, %s38
      %s42 = sphi 0, %s41
      %s58 = sphi 0, %s42
      %s62 = sphi 0, %s62
      %s64 = sphi 0, %s62
      %s65 = sphi 0, %s64
      %s79 = sphi 0, %s65
      %s83 = sphi 0, %s83
      %s85 = sphi 0, %s83
      %s86 = sphi 0, %s85
      %s100 = sphi 0, %s86
      %s104 = sphi 0, %s104
      %s106 = sphi 0, %s104
      %s107 = sphi 0, %s106
      %s121 = sphi 0, %s107
      %s125 = sphi 0, %s125
      %s127 = sphi 0, %s125
      %s128 = sphi 0, %s127
      %s142 = sphi 0, %s128
      %s150 = sphi 0, %s152
      %s153 = sphi 0, %s150
      %s154 = sphi 0, %s153
      %s170 = sphi 0, %s154
    $region4: #{tpu_custom_call.1} parent=1 // loop_header_branch
      %17 = sbr.rel (%p15) target = $region8
    $region5: #{tpu_custom_call.1} parent=1 // loop_body
      %s19 = ssub.s32 %s14, 1
      %s20 = ssub.s32 %s14, 2
      %s27 = sadd.s32 1, %s22
      %p28 = scmp.ge.s32.totalorder %s27, 1
      %s29 = scalar_select %p28, 0, %s27
      %s30 = sadd.s32 1, %s21
      %s31 = scalar_select %p28, %s30, %s21
      %p32 = scmp.ge.s32.totalorder %s31, 2
      %s33 = scalar_select %p32, 0, %s31
      %s34 = ssub.s32 %s21, %s33
      %s35 = ssub.s32 %s22, %s29
      %s36 = sor.u32 %s34, %s35
      %p37 = scmp.eq.s32.totalorder %s36, 0
      %s39 = sadd.s32 %s38, 1
      %s40 = scalar_select %p37, %s38, %s39
      %p43 = pneg %p37
      %p44 = scmp.eq.s32.totalorder %s14, 1
      %p45 = por %p43, %p44
      %p46 = scmp.ne.s32.totalorder %s38, %s41
      %p47 = scmp.eq.s32.totalorder %s14, 0
      %p48 = por %p46, %p47
      %p49 = scmp.ne.s32.totalorder %s38, %s41
      %p50 = scmp.eq.s32.totalorder %s19, 1
      %p51 = por %p49, %p50
      %p52 = scmp.ne.s32.totalorder %s41, %s42
      %p53 = scmp.eq.s32.totalorder %s19, 0
      %p54 = por %p52, %p53
      %p55 = scmp.ne.s32.totalorder %s41, %s42
      %p56 = scmp.eq.s32.totalorder %s20, 1
      %p57 = por %p55, %p56
      %p59 = scmp.ne.s32.totalorder %s42, %s58
      %p60 = scmp.eq.s32.totalorder %s20, 0
      %p61 = por %p59, %p60
      %s63 = sadd.s32 %s62, 1
      %p66 = scmp.eq.s32.totalorder %s14, 1
      %p67 = scmp.ne.s32.totalorder %s62, %s64
      %p68 = scmp.eq.s32.totalorder %s14, 0
      %p69 = por %p67, %p68
      %p70 = scmp.ne.s32.totalorder %s62, %s64
      %p71 = scmp.eq.s32.totalorder %s19, 1
      %p72 = por %p70, %p71
      %p73 = scmp.ne.s32.totalorder %s64, %s65
      %p74 = scmp.eq.s32.totalorder %s19, 0
      %p75 = por %p73, %p74
      %p76 = scmp.ne.s32.totalorder %s64, %s65
      %p77 = scmp.eq.s32.totalorder %s20, 1
      %p78 = por %p76, %p77
      %p80 = scmp.ne.s32.totalorder %s65, %s79
      %p81 = scmp.eq.s32.totalorder %s20, 0
      %p82 = por %p80, %p81
      %s84 = sadd.s32 %s83, 1
      %p87 = scmp.eq.s32.totalorder %s14, 1
      %p88 = scmp.ne.s32.totalorder %s83, %s85
      %p89 = scmp.eq.s32.totalorder %s14, 0
      %p90 = por %p88, %p89
      %p91 = scmp.ne.s32.totalorder %s83, %s85
      %p92 = scmp.eq.s32.totalorder %s19, 1
      %p93 = por %p91, %p92
      %p94 = scmp.ne.s32.totalorder %s85, %s86
      %p95 = scmp.eq.s32.totalorder %s19, 0
      %p96 = por %p94, %p95
      %p97 = scmp.ne.s32.totalorder %s85, %s86
      %p98 = scmp.eq.s32.totalorder %s20, 1
      %p99 = por %p97, %p98
      %p101 = scmp.ne.s32.totalorder %s86, %s100
      %p102 = scmp.eq.s32.totalorder %s20, 0
      %p103 = por %p101, %p102
      %s105 = sadd.s32 %s104, 1
      %p108 = scmp.eq.s32.totalorder %s14, 1
      %p109 = scmp.ne.s32.totalorder %s104, %s106
      %p110 = scmp.eq.s32.totalorder %s14, 0
      %p111 = por %p109, %p110
      %p112 = scmp.ne.s32.totalorder %s104, %s106
      %p113 = scmp.eq.s32.totalorder %s19, 1
      %p114 = por %p112, %p113
      %p115 = scmp.ne.s32.totalorder %s106, %s107
      %p116 = scmp.eq.s32.totalorder %s19, 0
      %p117 = por %p115, %p116
      %p118 = scmp.ne.s32.totalorder %s106, %s107
      %p119 = scmp.eq.s32.totalorder %s20, 1
      %p120 = por %p118, %p119
      %p122 = scmp.ne.s32.totalorder %s107, %s121
      %p123 = scmp.eq.s32.totalorder %s20, 0
      %p124 = por %p122, %p123
      %s126 = sadd.s32 %s125, 1
      %p129 = scmp.eq.s32.totalorder %s14, 1
      %p130 = scmp.ne.s32.totalorder %s125, %s127
      %p131 = scmp.eq.s32.totalorder %s14, 0
      %p132 = por %p130, %p131
      %p133 = scmp.ne.s32.totalorder %s125, %s127
      %p134 = scmp.eq.s32.totalorder %s19, 1
      %p135 = por %p133, %p134
      %p136 = scmp.ne.s32.totalorder %s127, %s128
      %p137 = scmp.eq.s32.totalorder %s19, 0
      %p138 = por %p136, %p137
      %p139 = scmp.ne.s32.totalorder %s127, %s128
      %p140 = scmp.eq.s32.totalorder %s20, 1
      %p141 = por %p139, %p140
      %p143 = scmp.ne.s32.totalorder %s128, %s142
      %p144 = scmp.eq.s32.totalorder %s20, 0
      %p145 = por %p143, %p144
      %s146 = ssub.s32 %s21, %s33
      %s147 = ssub.s32 %s22, %s29
      %s148 = sor.u32 %s146, %s147
      %p149 = scmp.eq.s32.totalorder %s148, 0
      %s151 = sadd.s32 %s150, 1
      %s152 = scalar_select %p149, %s150, %s151
      %p155 = pneg %p149
      %p156 = scmp.eq.s32.totalorder %s14, 1
      %p157 = por %p155, %p156
      %p158 = scmp.ne.s32.totalorder %s150, %s153
      %p159 = scmp.eq.s32.totalorder %s14, 0
      %p160 = por %p158, %p159
      %p161 = scmp.ne.s32.totalorder %s150, %s153
      %p162 = scmp.eq.s32.totalorder %s19, 1
      %p163 = por %p161, %p162
      %p164 = scmp.ne.s32.totalorder %s153, %s154
      %p165 = scmp.eq.s32.totalorder %s19, 0
      %p166 = por %p164, %p165
      %p167 = scmp.ne.s32.totalorder %s153, %s154
      %p168 = scmp.eq.s32.totalorder %s20, 1
      %p169 = por %p167, %p168
      %p171 = scmp.ne.s32.totalorder %s154, %s170
      %p172 = scmp.eq.s32.totalorder %s20, 0
      %p173 = por %p171, %p172
      %p174 = scmp.le.s32.totalorder 1, %s14
      %p175 = scmp.lt.s32.totalorder %s14, 3
      %p176 = pnand %p174, %p175
      %p177 = pneg %p176
      // Predicated region
      $region9: #{tpu_custom_call.1} parent=5 // pred_check
        _
      $region10: #{tpu_custom_call.1} parent=5 // pred_check_branch
        %179 = sbr.rel (%p176) target = $region12
      $region11: #{tpu_custom_call.1} parent=5 // pred_region
        %s180 = ssub.s32 %s14, 1
        // Predicated region
        $region13: #{tpu_custom_call.1} parent=11 // pred_check
          %p181 = pneg %p75
        $region14: #{tpu_custom_call.1} parent=11 // pred_check_branch
          %183 = sbr.rel (%p181) target = $region16
        $region15: #{tpu_custom_call.1} parent=11 // pred_region
          _
        $region16: #{tpu_custom_call.1} parent=11 // pred_fallthru
          _
        // Predicated region
        $region17: #{tpu_custom_call.1} parent=11 // pred_check
          %p184 = pneg %p96
        $region18: #{tpu_custom_call.1} parent=11 // pred_check_branch
          %186 = sbr.rel (%p184) target = $region20
        $region19: #{tpu_custom_call.1} parent=11 // pred_region
          _
        $region20: #{tpu_custom_call.1} parent=11 // pred_fallthru
          _
        // Predicated region
        $region21: #{tpu_custom_call.1} parent=11 // pred_check
          %p187 = pneg %p117
        $region22: #{tpu_custom_call.1} parent=11 // pred_check_branch
          %189 = sbr.rel (%p187) target = $region24
        $region23: #{tpu_custom_call.1} parent=11 // pred_region
          _
        $region24: #{tpu_custom_call.1} parent=11 // pred_fallthru
          _
        // Predicated region
        $region25: #{tpu_custom_call.1} parent=11 // pred_check
          %p190 = pneg %p138
        $region26: #{tpu_custom_call.1} parent=11 // pred_check_branch
          %192 = sbr.rel (%p190) target = $region28
        $region27: #{tpu_custom_call.1} parent=11 // pred_region
          _
        $region28: #{tpu_custom_call.1} parent=11 // pred_fallthru
          _
      $region12: #{tpu_custom_call.1} parent=5 // pred_fallthru
        _
      %p193 = scmp.lt.s32.totalorder %s14, 2
      // Predicated region
      $region29: #{tpu_custom_call.1} parent=5 // pred_check
        %p194 = pneg %p193
      $region30: #{tpu_custom_call.1} parent=5 // pred_check_branch
        %196 = sbr.rel (%p194) target = $region32
      $region31: #{tpu_custom_call.1} parent=5 // pred_region
        // Predicated region
        $region33: #{tpu_custom_call.1} parent=31 // pred_check
          %p197 = pneg %p48
        $region34: #{tpu_custom_call.1} parent=31 // pred_check_branch
          %199 = sbr.rel (%p197) target = $region36
        $region35: #{tpu_custom_call.1} parent=31 // pred_region
          %s200 = smul.u32 2, %s22
          %p201 = scmp.lt.s32.totalorder %s21, 1
          %s202 = scalar_select %p201, %s21, 1
          %p203 = scmp.lt.s32.totalorder %s200, 1
          %s204 = scalar_select %p203, %s200, 1
          %s205 = smul.addr %s202, 38
          %s206 = sadd.s32 %s204, %s205
          %s207 = smul.addr %s206, 8
          %s208 = scalar_lea.vmem %s0, %s207
          %s209 = smul.u32 2, %s22
        $region36: #{tpu_custom_call.1} parent=31 // pred_fallthru
          _
      $region32: #{tpu_custom_call.1} parent=5 // pred_fallthru
        _
      %p210 = scmp.le.s32.totalorder 1, %s14
      %p211 = scmp.lt.s32.totalorder %s14, 3
      %p212 = pnand %p210, %p211
      %p213 = pneg %p212
      // Predicated region
      $region37: #{tpu_custom_call.1} parent=5 // pred_check
        _
      $region38: #{tpu_custom_call.1} parent=5 // pred_check_branch
        %215 = sbr.rel (%p212) target = $region40
      $region39: #{tpu_custom_call.1} parent=5 // pred_region
        %s216 = ssub.s32 %s14, 1
        %s217 = smul.u32 2, %s24
        %p218 = scmp.lt.s32.totalorder %s23, 1
        %s219 = scalar_select %p218, %s23, 1
        %p220 = scmp.lt.s32.totalorder %s217, 1
        %s221 = scalar_select %p220, %s217, 1
        %s222 = smul.addr %s219, 38
        %s223 = sadd.s32 %s221, %s222
        %s224 = smul.addr %s223, 8
        %s225 = scalar_lea.vmem %s0, %s224
        %p226 = pneg %p54
        %p227 = pneg %p51
        %p228 = pneg %p75
        %p229 = pneg %p72
        %p230 = pneg %p96
        %p231 = pneg %p93
        %p232 = pneg %p117
        %p233 = pneg %p114
        %p234 = pneg %p138
        %p235 = pneg %p135
        %p236 = pneg %p166
        %p237 = pneg %p163
        %s238 = sand.u32 %s153, 1
        %s239 = scalar_lea.sflag [#allocation3], %s238
        %s240 = sand.u32 %s153, 1
        %s241 = smul.addr %s240, 64
        %s242 = scalar_lea.vmem [#allocation2], %s241
        %s243 = smul.u32 2, %s24
        %p244 = scmp.lt.s32.totalorder %s23, 1
        %s245 = scalar_select %p244, %s23, 1
        %p246 = scmp.lt.s32.totalorder %s243, 1
        %s247 = scalar_select %p246, %s243, 1
        %s248 = smul.addr %s245, 38
        %s249 = sadd.s32 %s247, %s248
        %s250 = smul.addr %s249, 8
        %s251 = scalar_lea.vmem %s0, %s250
        %s252 = smul.u32 2, %s24
        %s253 = smul.u32 2, %s24
        %v254 = vld [vmem:[%s1] sm:$0xff]
        %v255 = vld [vmem:[%s1 + $0x8] sm:$0xff]
        %v256 = vld [vmem:[%s1 + $0x10] sm:$0xff]
        %v257 = vld [vmem:[%s1 + $0x18] sm:$0xff]
        %v258 = vld [vmem:[%s1 + $0x20] sm:$0xff]
        %v259 = vld [vmem:[%s1 + $0x28] sm:$0xff]
        %v260 = vld [vmem:[%s1 + $0x30] sm:$0xff]
        %v261 = vld [vmem:[%s1 + $0x38] sm:$0xff]
        %v262 = vld [vmem:[%s251] sm:$0xff]
        %v263 = vld [vmem:[%s251 + $0x8] sm:$0xff]
        %v264 = vld [vmem:[%s251 + $0x10] sm:$0xff]
        %v265 = vld [vmem:[%s251 + $0x18] sm:$0xff]
        %v266 = vld [vmem:[%s251 + $0x20] sm:$0xff]
        %v267 = vld [vmem:[%s251 + $0x28] sm:$0xff]
        %v268 = vld [vmem:[%s251 + $0x30] sm:$0xff]
        %v269 = vld [vmem:[%s251 + $0x38] sm:$0xff]
        %v270 = vld [vmem:[%s251 + $0x40] sm:$0xff]
        %v271 = vld [vmem:[%s251 + $0x48] sm:$0xff]
        %v272 = vld [vmem:[%s251 + $0x50] sm:$0xff]
        %v273 = vld [vmem:[%s251 + $0x58] sm:$0xff]
        %v274 = vld [vmem:[%s251 + $0x60] sm:$0xff]
        %v275 = vld [vmem:[%s251 + $0x68] sm:$0xff]
        %v276 = vld [vmem:[%s251 + $0x70] sm:$0xff]
        %v277 = vld [vmem:[%s251 + $0x78] sm:$0xff]
        %v278 = vld [vmem:[%s251 + $0x80] sm:$0xff]
        %v279 = vld [vmem:[%s251 + $0x88] sm:$0xff]
        %v280 = vld [vmem:[%s251 + $0x90] sm:$0xff]
        %v281 = vld [vmem:[%s251 + $0x98] sm:$0xff]
        %v282 = vld [vmem:[%s251 + $0xa0] sm:$0xff]
        %v283 = vld [vmem:[%s251 + $0xa8] sm:$0xff]
        %v284 = vld [vmem:[%s251 + $0xb0] sm:$0xff]
        %v285 = vld [vmem:[%s251 + $0xb8] sm:$0xff]
        %v286 = vld [vmem:[%s251 + $0xc0] sm:$0xff]
        %v287 = vld [vmem:[%s251 + $0xc8] sm:$0xff]
        %v288 = vld [vmem:[%s251 + $0xd0] sm:$0xff]
        %v289 = vld [vmem:[%s251 + $0xd8] sm:$0xff]
        %v290 = vld [vmem:[%s251 + $0xe0] sm:$0xff]
        %v291 = vld [vmem:[%s251 + $0xe8] sm:$0xff]
        %v292 = vld [vmem:[%s251 + $0xf0] sm:$0xff]
        %v293 = vld [vmem:[%s251 + $0xf8] sm:$0xff]
        %v294 = vld [vmem:[%s251 + $0x100] sm:$0xff]
        %v295 = vld [vmem:[%s251 + $0x108] sm:$0xff]
        %v296 = vld [vmem:[%s251 + $0x110] sm:$0xff]
        %v297 = vld [vmem:[%s251 + $0x118] sm:$0xff]
        %v298 = vld [vmem:[%s251 + $0x120] sm:$0x7]
        %v299 = vld [vmem:[%s251 + $0x128] sm:$0x7]
        %v300 = vld [vmem:[%s2] sm:$0xff]
        %v301 = vld [vmem:[%s2 + $0x8] sm:$0xff]
        %v302 = vld [vmem:[%s2 + $0x10] sm:$0xff]
        %v303 = vld [vmem:[%s2 + $0x18] sm:$0xff]
        %305 = vset.pattern.permute.xlu0 0
        %306 = vperm.xlu0 %305, %v300
        %v307 = vpop.permute.xlu0 %306
        %310 = vset.pattern.permute.xlu0 0
        %311 = vperm.xlu0 %310, %v301
        %v312 = vpop.permute.xlu0 %311
        %315 = vset.pattern.permute.xlu0 0
        %316 = vperm.xlu0 %315, %v302
        %v317 = vpop.permute.xlu0 %316
        %320 = vset.pattern.permute.xlu0 0
        %321 = vperm.xlu0 %320, %v303
        %v322 = vpop.permute.xlu0 %321
        %vm324 = vcmask 154624
        %v326 = vsel %vm324, %v255, 0
        %v329 = vsel %vm324, %v257, 0
        %v332 = vsel %vm324, %v259, 0
        %v335 = vsel %vm324, %v261, 0
        %vm337 = vcmask 1042432
        %v339 = vsel %vm337, %v298, 0
        %v342 = vsel %vm337, %v299, 0
        %344 = vmatprep.subr.mxu0 %v293
        %345 = vmatpush1.msra.mxu0 %v292
        %346 = vmatprep.subr.mxu0 %v291
        %347 = vmatpush1.msra.mxu0 %v290
        %348 = vmatprep.subr.mxu0 %v289
        %349 = vmatpush1.msra.mxu0 %v288
        %350 = vmatprep.subr.mxu0 %v287
        %351 = vmatpush1.msra.mxu0 %v286
        %352 = vmatprep.subr.mxu0 %v285
        %353 = vmatpush1.msra.mxu0 %v284
        %354 = vmatprep.subr.mxu0 %v283
        %355 = vmatpush1.msra.mxu0 %v282
        %356 = vmatprep.subr.mxu0 %v281
        %357 = vmatpush1.msra.mxu0 %v280
        %358 = vmatprep.subr.mxu0 %v279
        %359 = vmatpush1.msra.mxu0 %v278
        %360 = vmatprep.subr.mxu0 %v277
        %361 = vmatpush1.msra.mxu0 %v276
        %362 = vmatprep.subr.mxu0 %v275
        %363 = vmatpush1.msra.mxu0 %v274
        %364 = vmatprep.subr.mxu0 %v273
        %365 = vmatpush1.msra.mxu0 %v272
        %366 = vmatprep.subr.mxu0 %v271
        %367 = vmatpush1.msra.mxu0 %v270
        %368 = vmatprep.subr.mxu0 %v269
        %369 = vmatpush1.msra.mxu0 %v268
        %370 = vmatprep.subr.mxu0 %v267
        %371 = vmatpush1.msra.mxu0 %v266
        %372 = vmatprep.subr.mxu0 %v265
        %373 = vmatpush1.msra.mxu0 %v264
        %374 = vmatprep.subr.mxu0 %v263
        %375 = vmatpush1.msra.mxu0 %v262
        %376 = vmatprep.subr.mxu0 0.0
        %377 = vmatpush2.msra.mxu0 0.0
        %378 = vmatprep.subr.mxu0 0.0
        %379 = vmatpush2.msra.mxu0 0.0
        %380 = vmatprep.subr.mxu0 0.0
        %381 = vmatpush2.msra.mxu0 0.0
        %382 = vmatprep.subr.mxu0 0.0
        %383 = vmatpush2.msra.mxu0 0.0
        %384 = vmatprep.subr.mxu0 0.0
        %385 = vmatpush2.msra.mxu0 0.0
        %386 = vmatprep.subr.mxu0 0.0
        %387 = vmatpush2.msra.mxu0 0.0
        %388 = vmatprep.subr.mxu0 0.0
        %389 = vmatpush2.msra.mxu0 0.0
        %390 = vmatprep.subr.mxu0 0.0
        %391 = vmatpush2.msra.mxu0 0.0
        %392 = vmatprep.subr.mxu0 0.0
        %393 = vmatpush2.msra.mxu0 0.0
        %394 = vmatprep.subr.mxu0 0.0
        %395 = vmatpush2.msra.mxu0 0.0
        %396 = vmatprep.subr.mxu0 0.0
        %397 = vmatpush2.msra.mxu0 0.0
        %398 = vmatprep.subr.mxu0 0.0
        %399 = vmatpush2.msra.mxu0 0.0
        %400 = vmatprep.subr.mxu0 0.0
        %401 = vmatpush2.msra.mxu0 0.0
        %402 = vmatprep.subr.mxu0 %v342
        %403 = vmatpush2.msra.mxu0 %v339
        %404 = vmatprep.subr.mxu0 %v297
        %405 = vmatpush2.msra.mxu0 %v296
        %406 = vmatprep.subr.mxu0 %v295
        %407 = vmatpush2.msra.mxu0 %v294
        %408 = vmatprep.mubr.f32.mxu0 %v326
        %409 = vmatmul.mubr.f32.gmra.mxu0 %v254
        %v410 = vpop.f32.mrf.mxu0
        %v411 = vadd.f32 %v307, %v410
        %v412 = vpop.f32.mrf.mxu0
        %v413 = vadd.f32 %v307, %v412
        %414 = vmatprep.mubr.f32.mxu0 %v329
        %415 = vmatmul.mubr.f32.gmra.mxu0 %v256
        %v416 = vpop.f32.mrf.mxu0
        %v417 = vadd.f32 %v312, %v416
        %v418 = vpop.f32.mrf.mxu0
        %v419 = vadd.f32 %v312, %v418
        %420 = vmatprep.mubr.f32.mxu0 %v332
        %421 = vmatmul.mubr.f32.gmra.mxu0 %v258
        %v422 = vpop.f32.mrf.mxu0
        %v423 = vadd.f32 %v317, %v422
        %v424 = vpop.f32.mrf.mxu0
        %v425 = vadd.f32 %v317, %v424
        %426 = vmatprep.mubr.f32.mxu0 %v335
        %427 = vmatmul.mubr.f32.gmra.mxu0 %v260
        %v428 = vpop.f32.mrf.mxu0
        %v429 = vadd.f32 %v322, %v428
        %v430 = vpop.f32.mrf.mxu0
        %v431 = vadd.f32 %v322, %v430
        %432 = vdwg.mxu0
        %v433 = vadd.f32 %v411, %v417
        %v434 = vadd.f32 %v433, %v423
        %v435 = vadd.f32 %v434, %v429
        %v436 = vrot.slane %v435, 4
        %v437 = vadd.f32 %v435, %v436
        %v438 = vrot.slane %v437, 2
        %v439 = vadd.f32 %v437, %v438
        %v440 = vrot.slane %v439, 1
        %v441 = vadd.f32 %v439, %v440
        %v442 = vadd.f32 %v413, %v419
        %v443 = vadd.f32 %v442, %v425
        %v444 = vadd.f32 %v443, %v431
        %v445 = vrot.slane %v444, 4
        %v446 = vadd.f32 %v444, %v445
        %v447 = vrot.slane %v446, 2
        %v448 = vadd.f32 %v446, %v447
        %v449 = vrot.slane %v448, 1
        %v450 = vadd.f32 %v448, %v449
        %v451 = vrcp.pop 32.0
        %v452 = vmul.f32 %v441, %v451
        %v453 = vmul.f32 %v450, %v451
        %v454 = vsub.f32 %v411, %v452
        %v455 = vsub.f32 %v413, %v453
        %v456 = vsub.f32 %v417, %v452
        %v457 = vsub.f32 %v419, %v453
        %v458 = vsub.f32 %v423, %v452
        %v459 = vsub.f32 %v425, %v453
        %v460 = vsub.f32 %v429, %v452
        %v461 = vsub.f32 %v431, %v453
        %v462 = vmul.f32 %v454, %v454
        %v463 = vmul.f32 %v455, %v455
        %v464 = vmul.f32 %v456, %v456
        %v465 = vmul.f32 %v457, %v457
        %v466 = vmul.f32 %v458, %v458
        %v467 = vmul.f32 %v459, %v459
        %v468 = vmul.f32 %v460, %v460
        %v469 = vmul.f32 %v461, %v461
        %v470 = vadd.f32 %v462, %v464
        %v471 = vadd.f32 %v470, %v466
        %v472 = vadd.f32 %v471, %v468
        %v473 = vrot.slane %v472, 4
        %v474 = vadd.f32 %v472, %v473
        %v475 = vrot.slane %v474, 2
        %v476 = vadd.f32 %v474, %v475
        %v477 = vrot.slane %v476, 1
        %v478 = vadd.f32 %v476, %v477
        %v479 = vadd.f32 %v463, %v465
        %v480 = vadd.f32 %v479, %v467
        %v481 = vadd.f32 %v480, %v469
        %v482 = vrot.slane %v481, 4
        %v483 = vadd.f32 %v481, %v482
        %v484 = vrot.slane %v483, 2
        %v485 = vadd.f32 %v483, %v484
        %v486 = vrot.slane %v485, 1
        %v487 = vadd.f32 %v485, %v486
        %v488 = vmul.f32 %v478, %v451
        %v489 = vmul.f32 %v487, %v451
        %v490 = vadd.f32 %v488, 1e-06
        %v491 = vadd.f32 %v489, 1e-06
        %v492 = vrsqrt.pop %v490
        %v493 = vrsqrt.pop %v491
        %v494 = vmul.f32 %v454, %v492
        %v495 = vmul.f32 %v455, %v493
        %v496 = vmul.f32 %v456, %v492
        %v497 = vmul.f32 %v457, %v493
        %v498 = vmul.f32 %v458, %v492
        %v499 = vmul.f32 %v459, %v493
        %v500 = vmul.f32 %v460, %v492
        %v501 = vmul.f32 %v461, %v493
        %v502 = vld [vmem:[%s3] sm:$0xff]
        %v503 = vld [vmem:[%s3 + $0x8] sm:$0xff]
        %v504 = vld [vmem:[%s3 + $0x10] sm:$0xff]
        %v505 = vld [vmem:[%s3 + $0x18] sm:$0xff]
        %507 = vset.pattern.permute.xlu0 0
        %508 = vperm.xlu0 %507, %v502
        %v509 = vpop.permute.xlu0 %508
        %512 = vset.pattern.permute.xlu0 0
        %513 = vperm.xlu0 %512, %v503
        %v514 = vpop.permute.xlu0 %513
        %517 = vset.pattern.permute.xlu0 0
        %518 = vperm.xlu0 %517, %v504
        %v519 = vpop.permute.xlu0 %518
        %522 = vset.pattern.permute.xlu0 0
        %523 = vperm.xlu0 %522, %v505
        %v524 = vpop.permute.xlu0 %523
        %v526 = vmul.f32 %v509, %v494
        %v527 = vmul.f32 %v509, %v495
        %v528 = vmul.f32 %v514, %v496
        %v529 = vmul.f32 %v514, %v497
        %v530 = vmul.f32 %v519, %v498
        %v531 = vmul.f32 %v519, %v499
        %v532 = vmul.f32 %v524, %v500
        %v533 = vmul.f32 %v524, %v501
        %v534 = vld [vmem:[%s4] sm:$0xff]
        %v535 = vld [vmem:[%s4 + $0x8] sm:$0xff]
        %v536 = vld [vmem:[%s4 + $0x10] sm:$0xff]
        %v537 = vld [vmem:[%s4 + $0x18] sm:$0xff]
        %539 = vset.pattern.permute.xlu0 0
        %540 = vperm.xlu0 %539, %v534
        %v541 = vpop.permute.xlu0 %540
        %544 = vset.pattern.permute.xlu0 0
        %545 = vperm.xlu0 %544, %v535
        %v546 = vpop.permute.xlu0 %545
        %549 = vset.pattern.permute.xlu0 0
        %550 = vperm.xlu0 %549, %v536
        %v551 = vpop.permute.xlu0 %550
        %554 = vset.pattern.permute.xlu0 0
        %555 = vperm.xlu0 %554, %v537
        %v556 = vpop.permute.xlu0 %555
        %v558 = vadd.f32 %v526, %v541
        %v559 = vadd.f32 %v527, %v541
        %v560 = vadd.f32 %v528, %v546
        %v561 = vadd.f32 %v529, %v546
        %v562 = vadd.f32 %v530, %v551
        %v563 = vadd.f32 %v531, %v551
        %v564 = vadd.f32 %v532, %v556
        %v565 = vadd.f32 %v533, %v556
        %566 = vst [vmem:[%s242] sm:$0xff] %v558
        %567 = vst [vmem:[%s242 + $0x8] sm:$0xff] %v559
        %568 = vst [vmem:[%s242 + $0x10] sm:$0xff] %v560
        %569 = vst [vmem:[%s242 + $0x18] sm:$0xff] %v561
        %570 = vst [vmem:[%s242 + $0x20] sm:$0xff] %v562
        %571 = vst [vmem:[%s242 + $0x28] sm:$0xff] %v563
        %572 = vst [vmem:[%s242 + $0x30] sm:$0xff] %v564
        %573 = vst [vmem:[%s242 + $0x38] sm:$0xff] %v565
        %s574 = sand.u32 %s153, 1
        %s575 = scalar_lea.sflag [#allocation3], %s574
        %s576 = sand.u32 %s153, 1
        %s577 = smul.addr %s576, 64
        %s578 = scalar_lea.vmem [#allocation2], %s577
        // Predicated region
        $region41: #{tpu_custom_call.1} parent=39 // pred_check
          %p579 = pneg %p163
        $region42: #{tpu_custom_call.1} parent=39 // pred_check_branch
          %581 = sbr.rel (%p579) target = $region44
        $region43: #{tpu_custom_call.1} parent=39 // pred_region
          %s582 = smul.u32 2, %s24
          %s584 = ssub.s32 1024, 1024
          %585 = vsyncadd %s575, %s584
          %s586 = smul.addr %s23, 8
          %s587 = sadd.s32 %s582, %s586
          %s588 = smul.addr %s587, 128
          %s589 = scalar_lea.hbm %s5, %s588
          %s590 = sshll.u32 %s578, 4
          %s591 = int_to_ptr.vmem [resolvable:$true] %s590
          %596 = dma.vmem_to_hbm [thread:$0]  %s591, 1024, %s589, %s575, 256, 256, 16
        $region44: #{tpu_custom_call.1} parent=39 // pred_fallthru
          _
      $region40: #{tpu_custom_call.1} parent=5 // pred_fallthru
        _
      %p597 = scmp.le.s32.totalorder 2, %s14
      // Predicated region
      $region45: #{tpu_custom_call.1} parent=5 // pred_check
        %p598 = pneg %p597
      $region46: #{tpu_custom_call.1} parent=5 // pred_check_branch
        %600 = sbr.rel (%p598) target = $region48
      $region47: #{tpu_custom_call.1} parent=5 // pred_region
        %s601 = ssub.s32 %s14, 2
        // Predicated region
        $region49: #{tpu_custom_call.1} parent=47 // pred_check
          %p602 = pneg %p169
        $region50: #{tpu_custom_call.1} parent=47 // pred_check_branch
          %604 = sbr.rel (%p602) target = $region52
        $region51: #{tpu_custom_call.1} parent=47 // pred_region
          %s605 = sand.u32 %s154, 1
          %s606 = scalar_lea.sflag [#allocation3], %s605
          %s607 = sand.u32 %s154, 1
          %s608 = smul.addr %s607, 64
          %s609 = scalar_lea.vmem [#allocation2], %s608
          %610 = dma.done %s606, 1024
        $region52: #{tpu_custom_call.1} parent=47 // pred_fallthru
          _
      $region48: #{tpu_custom_call.1} parent=5 // pred_fallthru
        _
    $region6: #{tpu_custom_call.1} parent=1 // loop_footer
      %s18 = sadd.s32 1, %s14
    $region7: #{tpu_custom_call.1} parent=1 // loop_footer_branch
      %13 = sbr.rel target = $region3
    $region8: #{tpu_custom_call.1} parent=1 // loop_exit
      _
    %611 = vsyncpa [#allocation3], 1
    %s612 = scalar_lea.sflag [#allocation3], 1
    %613 = vsyncpa %s612, 1

</llo_original>
